<compile_context>
chip_gen: v5e
topology: v5e:2x2
jax: 0.10.0
libtpu: 0.0.40
codegen_flags: <defaults>
</compile_context>

<pallas_src>
import jax
import jax.numpy as jnp
from jax.experimental import pallas as pl
from jax.experimental.pallas import tpu as pltpu

_LANE = 128


def _round_up(n, m):
    return ((n + m - 1) // m) * m


def _pack(dtype):
    # sublane pack factor: f32 -> 8, bf16/f16 -> 16, int8/fp8 -> 32
    return {4: 8, 2: 16, 1: 32}.get(jnp.dtype(dtype).itemsize, 8)


def _device_kind():
    try:
        return jax.devices()[0].device_kind.lower()
    except Exception:
        return ""


def _num_tensorcores():
    # v7x exposes 2 TensorCores per chip; v5e / v6e have 1.
    return 2 if "v7" in _device_kind() else 1


def _vmem_capacity_bytes():
    try:
        info = pltpu.get_tpu_info()
        cap = getattr(info, "vmem_capacity_bytes", None)
        if cap:
            return int(cap)
    except Exception:
        pass
    return 64 << 20  # conservative default (v7x per-TC VMEM)


def _vmem_budget_bytes():
    cap = _vmem_capacity_bytes()
    # 128 MiB chips (v5e/v6e) -> ~112 MiB scoped budget; 64 MiB (v7x) -> ~48 MiB.
    return max(min(cap - (16 << 20), 112 << 20), 16 << 20)


# ---------------------------------------------------------------------------
# Generic path: standalone, lane-dense residual add (arbitrary black-box fn).
# ---------------------------------------------------------------------------
def _residual_add_kernel(y_ref, x_ref, o_ref):
    # Promote on the VPU (free in a mem-bound kernel), matching torch's
    # `fn(x) + x` promotion; inputs stream in their native dtypes.
    o_ref[...] = y_ref[...].astype(o_ref.dtype) + x_ref[...].astype(o_ref.dtype)


def _pallas_residual_add(y, x):
    """Elementwise y + x on TPU via Pallas. No wrapper-side pad/slice passes."""
    assert y.shape == x.shape, "Residual requires fn to be shape-preserving"
    out_dtype = jnp.result_type(y.dtype, x.dtype)  # torch-style promotion
    orig_shape = x.shape
    total = int(x.size)
    if total == 0:
        return (y.astype(out_dtype) + x.astype(out_dtype)).reshape(orig_shape)

    itemsum = (
        jnp.dtype(y.dtype).itemsize
        + jnp.dtype(x.dtype).itemsize
        + jnp.dtype(out_dtype).itemsize
    )
    budget = _vmem_budget_bytes()
    # Double-buffered in/out pipelining -> per-step footprint <= budget/2.
    max_block_elems = max((budget // 2 - (4 << 20)) // itemsum, 8 * _LANE)
    dual_tc = _num_tensorcores() >= 2

    yf = y.reshape(-1)
    xf = x.reshape(-1)

    if total % _LANE == 0:
        # 2-D lane-dense path (reshape is free): wide lane dim keeps stores
        # unmasked and rows long per DMA descriptor.
        lw = _LANE
        for cand in (1024, 512, 256):
            if total % cand == 0:
                lw = cand
                break
        rows = total // lw
        pack = max(_pack(y.dtype), _pack(x.dtype), _pack(out_dtype))
        max_br = max(max_block_elems // lw, 1)
        nblocks = pl.cdiv(rows, max_br)
        if dual_tc:
            # v7x only: expose an (even) parallel split across the two TCs.
            per_op_bytes = total * jnp.dtype(out_dtype).itemsize
            if nblocks == 1 and rows >= 2 * pack and per_op_bytes >= (256 << 10):
                nblocks = 2
            elif nblocks > 1 and nblocks % 2:
                nblocks += 1
        if nblocks <= 1:
            br = rows  # full-extent block, always legal
            nblocks = 1
        else:
            br = min(_round_up(pl.cdiv(rows, nblocks), pack), rows)
            nblocks = pl.cdiv(rows, br)  # tail block masked by Pallas
        y2 = yf.reshape(rows, lw)
        x2 = xf.reshape(rows, lw)
        in_specs = [
            pl.BlockSpec((br, lw), lambda i: (i, 0)),
            pl.BlockSpec((br, lw), lambda i: (i, 0)),
        ]
        out_spec = pl.BlockSpec((br, lw), lambda i: (i, 0))
        out_shape = jax.ShapeDtypeStruct((rows, lw), out_dtype)
        grid = (nblocks,)
        operands = (y2, x2)
    else:
        # Ragged total: tile the lane axis of a (1, total) view with a cdiv
        # grid; the tail block is masked in-kernel by Pallas.  No jnp.pad and
        # no output slice (each would be a full extra HBM read+write pass).
        blk = (min(max_block_elems, total) // _LANE) * _LANE
        if blk <= 0 or blk >= total:
            blk = total  # single full-extent block (always legal)
        nblocks = pl.cdiv(total, blk)
        y2 = yf.reshape(1, total)
        x2 = xf.reshape(1, total)
        in_specs = [
            pl.BlockSpec((1, blk), lambda i: (0, i)),
            pl.BlockSpec((1, blk), lambda i: (0, i)),
        ]
        out_spec = pl.BlockSpec((1, blk), lambda i: (0, i))
        out_shape = jax.ShapeDtypeStruct((1, total), out_dtype)
        grid = (nblocks,)
        operands = (y2, x2)

    extra = {}
    if jnp.dtype(y.dtype) == jnp.dtype(out_dtype):
        # fn's output is a dead intermediate inside Residual; let XLA reuse
        # its HBM buffer for the result (no extra allocation).  NOTE: footgun
        # if this helper is ever called with a caller-owned `y`.
        extra["input_output_aliases"] = {0: 0}

    out = pl.pallas_call(
        _residual_add_kernel,
        out_shape=out_shape,
        grid=grid,
        in_specs=in_specs,
        out_specs=out_spec,
        compiler_params=pltpu.CompilerParams(
            dimension_semantics=("parallel",),
            vmem_limit_bytes=int(budget),
        ),
        cost_estimate=pl.CostEstimate(
            flops=total,
            transcendentals=0,
            bytes_accessed=total * itemsum,
        ),
        **extra,
    )(*operands)
    return out.reshape(orig_shape)


# ---------------------------------------------------------------------------
# Fused path: 1x1 NCHW channel-mix + bias with the residual add fused in.
# Single HBM pass over x; output written lane-dense over the H*W axis.
# ---------------------------------------------------------------------------
def _channelmix_residual_kernel(w_ref, b_ref, x_ref, o_ref):
    x = x_ref[...]  # (C, t)
    # Default MXU precision (HIGHEST on f32 would trigger multi-pass bf16
    # emulation, 3-6x the MXU work for no benefit in this module).
    y = jnp.dot(w_ref[...], x, preferred_element_type=jnp.float32)
    o_ref[...] = (y + b_ref[...] + x.astype(jnp.float32)).astype(o_ref.dtype)


def _pallas_channelmix_residual(x, w, b):
    B, C, H, W = x.shape
    HW = H * W
    out_dtype = jnp.result_type(x.dtype, w.dtype, b.dtype)

    budget = _vmem_budget_bytes()
    itemx = jnp.dtype(x.dtype).itemsize
    itemo = jnp.dtype(out_dtype).itemsize
    fixed = 2 * (C * C * jnp.dtype(w.dtype).itemsize + C * jnp.dtype(b.dtype).itemsize)
    per_t = 2 * C * (itemx + itemo)  # double-buffered x / out blocks per lane
    t_max = max((budget - fixed - (4 << 20)) // per_t, _LANE)
    t_max = (t_max // _LANE) * _LANE
    if t_max >= HW:
        t = HW  # full-extent lane block (legal even if HW % 128 != 0)
    else:
        t = t_max  # multiple of 128; cdiv grid masks the tail block

    # v7x: make sure the parallel grid has >=2 steps to feed both TensorCores.
    if _num_tensorcores() >= 2 and B == 1 and t >= HW and HW >= 2 * _LANE:
        t = _round_up(pl.cdiv(HW, 2), _LANE)

    n_hw = pl.cdiv(HW, t)
    x3 = x.reshape(B, C, HW)
    b2 = b.reshape(C, 1)

    # TODO(synk): tile C_out / K (f32 VMEM accumulator, pl.when init/finalize)
    # and pad C to an MXU-friendly multiple when C is large; at small C this
    # kernel is DMA-bound and the matmul is effectively free.
    out = pl.pallas_call(
        _channelmix_residual_kernel,
        out_shape=jax.ShapeDtypeStruct((B, C, HW), out_dtype),
        grid=(B, n_hw),
        in_specs=[
            pl.BlockSpec((C, C), lambda n, j: (0, 0)),
            pl.BlockSpec((C, 1), lambda n, j: (0, 0)),
            pl.BlockSpec((None, C, t), lambda n, j: (n, 0, j)),
        ],
        out_specs=pl.BlockSpec((None, C, t), lambda n, j: (n, 0, j)),
        compiler_params=pltpu.CompilerParams(
            dimension_semantics=("parallel", "parallel"),
            vmem_limit_bytes=int(budget),
        ),
        cost_estimate=pl.CostEstimate(
            flops=2 * B * C * C * HW + 2 * B * C * HW,
            transcendentals=0,
            bytes_accessed=B * C * HW * (itemx + itemo) + fixed // 2,
        ),
    )(w, b2, x3)
    return out.reshape(B, C, H, W)


class PallasChannelMix:
    """1x1 NCHW conv (channel mix) + bias.  Exposes a fused fn(x)+x kernel."""

    def __init__(self, w, b):
        self.w = w
        self.b = b

    def __call__(self, x):
        return jnp.einsum("oc,nchw->nohw", self.w, x) + self.b[None, :, None, None]

    def fused_residual(self, x):
        return _pallas_channelmix_residual(x, self.w, self.b)


class Residual:
    """Pallas/JAX port of ddiff.layers.Residual: fn(x, *a, **kw) + x."""

    def __init__(self, fn):
        self.fn = fn

    def __call__(self, x, *args, **kwargs):
        fused = getattr(self.fn, "fused_residual", None)
        if fused is not None and not args and not kwargs:
            # fn(x) + x computed in one Pallas kernel: one HBM pass, no
            # intermediate y written/re-read.
            return fused(x)
        y = self.fn(x, *args, **kwargs)  # arbitrary inner module
        return _pallas_residual_add(y, x)  # Pallas residual add


if __name__ == "__main__":
    key = jax.random.PRNGKey(0)
    kx, kw, kb, kx2, kx3 = jax.random.split(key, 5)

    # --- Path 1: fused fn(x) + x in a single Pallas kernel -----------------
    B, C, H, W = 2, 4, 16, 16
    w = jax.random.normal(kw, (C, C), dtype=jnp.float32) * 0.1
    b = jax.random.normal(kb, (C,), dtype=jnp.float32) * 0.1
    x = jax.random.normal(kx, (B, C, H, W), dtype=jnp.float32)

    residual = Residual(PallasChannelMix(w, b))
    out = jax.block_until_ready(residual(x))
    ref = (
        jnp.einsum("oc,nchw->nohw", w, x, precision=jax.lax.Precision.HIGHEST)
        + b[None, :, None, None]
        + x
    )
    assert out.shape == x.shape
    # Kernel matmul runs at MXU default precision -> compare loosely vs f32 ref.
    assert jnp.allclose(out, ref, atol=1e-2, rtol=1e-2)

    # --- Path 2a: generic black-box fn, ragged size (no pad/slice passes) ---
    x2 = jax.random.normal(kx2, (3, 5, 7), dtype=jnp.float32)
    gen = Residual(lambda t: jnp.tanh(t) * 0.5)
    out2 = jax.block_until_ready(gen(x2))
    ref2 = jnp.tanh(x2) * 0.5 + x2
    assert out2.shape == x2.shape and out2.dtype == x2.dtype
    assert jnp.allclose(out2, ref2, atol=1e-6, rtol=1e-6)

    # --- Path 2b: generic fn, 128-aligned size (wide lane-dense 2-D path) ---
    x3 = jax.random.normal(kx3, (8, 32, 128), dtype=jnp.bfloat16)
    out3 = jax.block_until_ready(gen(x3))
    ref3 = jnp.tanh(x3.astype(jnp.float32)) * 0.5 + x3.astype(jnp.float32)
    assert out3.shape == x3.shape and out3.dtype == x3.dtype
    assert jnp.allclose(out3.astype(jnp.float32), ref3, atol=2e-2, rtol=2e-2)

    print("KERNEL_OK")
</pallas_src>

<mosaic_0001>
module attributes {stable_mosaic.version = 11 : i64} {
  func.func @_channelmix_residual_kernel(%arg0: i32, %arg1: i32, %arg2: memref<4x4xf32, #tpu.memory_space<vmem>>, %arg3: memref<4x1xf32, #tpu.memory_space<vmem>>, %arg4: memref<1x4x256xf32, #tpu.memory_space<vmem>>, %arg5: memref<1x4x256xf32, #tpu.memory_space<vmem>>) attributes {dimension_semantics = [#tpu.dimension_semantics<parallel>, #tpu.dimension_semantics<parallel>], iteration_bounds = array<i64: 2, 1>, scalar_prefetch = 0 : i64, scratch_operands = 0 : i64, tpu.core_type = #tpu.core_type<tc>, window_params = [{pipeline_mode = #tpu.pipeline_mode<synchronous>, transform_indices = @transform_0, window_bounds = array<i64: 4, 4>}, {pipeline_mode = #tpu.pipeline_mode<synchronous>, transform_indices = @transform_1, window_bounds = array<i64: 4, 1>}, {transform_indices = @transform_2, window_bounds = array<i64: 1, 4, 256>}, {transform_indices = @transform_3, window_bounds = array<i64: 1, 4, 256>}]} {
    %c0 = arith.constant 0 : index
    %c0_0 = arith.constant 0 : index
    %c0_1 = arith.constant 0 : index
    %0 = vector.load %arg4[%c0, %c0_0, %c0_1] : memref<1x4x256xf32, #tpu.memory_space<vmem>>, vector<1x4x256xf32>
    %1 = vector.shape_cast %0 : vector<1x4x256xf32> to vector<4x256xf32>
    %c0_2 = arith.constant 0 : index
    %c0_3 = arith.constant 0 : index
    %2 = vector.load %arg2[%c0_2, %c0_3] : memref<4x4xf32, #tpu.memory_space<vmem>>, vector<4x4xf32>
    %cst = arith.constant dense<0.000000e+00> : vector<4x256xf32>
    %3 = tpu.matmul %2, %1, %cst {dimension_numbers = #tpu.dot_dimension_numbers<[1], [0], [0], [1], [0, 0, 1, 1], [], []>} : vector<4x4xf32>, vector<4x256xf32>, vector<4x256xf32> -> vector<4x256xf32>
    %c0_4 = arith.constant 0 : index
    %c0_5 = arith.constant 0 : index
    %4 = vector.load %arg3[%c0_4, %c0_5] : memref<4x1xf32, #tpu.memory_space<vmem>>, vector<4x1xf32>
    %5 = vector.broadcast %4 : vector<4x1xf32> to vector<4x256xf32>
    %6 = arith.addf %3, %5 : vector<4x256xf32>
    %7 = arith.addf %6, %1 : vector<4x256xf32>
    %c0_6 = arith.constant 0 : index
    %c0_7 = arith.constant 0 : index
    %c0_8 = arith.constant 0 : index
    %8 = vector.load %arg5[%c0_6, %c0_7, %c0_8] : memref<1x4x256xf32, #tpu.memory_space<vmem>>, vector<1x4x256xf32>
    %9 = vector.shape_cast %8 : vector<1x4x256xf32> to vector<4x256xf32>
    %10 = vector.shape_cast %7 : vector<4x256xf32> to vector<1x4x256xf32>
    tpu.vector_store %arg5[%c0_6, %c0_7, %c0_8], %10 {strides = array<i32>} : memref<1x4x256xf32, #tpu.memory_space<vmem>>, vector<1x4x256xf32>,
    return
  }
  func.func @transform_0(%arg0: i32, %arg1: i32) -> (i32, i32) {
    %c0_i32 = arith.constant 0 : i32
    %c0_i32_0 = arith.constant 0 : i32
    %c0_i32_1 = arith.constant 0 : i32
    return %c0_i32, %c0_i32_0 : i32, i32
  }
  func.func @transform_1(%arg0: i32, %arg1: i32) -> (i32, i32) {
    %c0_i32 = arith.constant 0 : i32
    %c0_i32_0 = arith.constant 0 : i32
    %c0_i32_1 = arith.constant 0 : i32
    return %c0_i32, %c0_i32_0 : i32, i32
  }
  func.func @transform_2(%arg0: i32, %arg1: i32) -> (i32, i32, i32) {
    %c0_i32 = arith.constant 0 : i32
    %c0_i32_0 = arith.constant 0 : i32
    return %arg0, %c0_i32, %arg1 : i32, i32, i32
  }
  func.func @transform_3(%arg0: i32, %arg1: i32) -> (i32, i32, i32) {
    %c0_i32 = arith.constant 0 : i32
    %c0_i32_0 = arith.constant 0 : i32
    return %arg0, %c0_i32, %arg1 : i32, i32, i32
  }
}

</mosaic_0001>

<llo_original>
// kernel: tpu_custom_call.1
$region0: #{tpu_custom_call.1}
  #allocation0 [shape = 'u32[]', space=smem, size = 0x4, offset = 0x4, fixed_abs, tag = 'smem constant byte address 0x4 - core index']
  #allocation1 [shape = 'u32[72,128]{1,0:T(1,128)}', space=vmem, size = 0x9000, scoped, tag = 'internal scratch']
  %s0 = inlined_call_operand.vmem [shape: f32[4,4], index: 0, kind: input, shape index: {}]
  %s1 = inlined_call_operand.vmem [shape: f32[4,1], index: 1, kind: input, shape index: {}]
  %s2 = inlined_call_operand.hbm [shape: f32[2,4,256], index: 2, kind: input, shape index: {}]
  %s3 = inlined_call_operand.hbm [shape: f32[2,4,256], index: 3, kind: output, shape index: {}]
  %s4 = sld [smem:[#allocation0]]
  $region49: #{tpu_custom_call.1} parent=0
    _
  %s6 = ssub.s32 1, %s4
  %s7 = scalar_select 0, %s6, %s4
  $region1: #{tpu_custom_call.1} parent=0
    #allocation2 [shape = 'u8[8192]{0}', space=vmem, size = 0x2000, scoped, tag = 'input window, operand 2']
    #allocation3 [shape = 's32[2]{0}', space=sflag, size = 0x8, scoped, tag = 'scoped memory for tpu_custom_call.1']
    #allocation4 [shape = 's32[2]{0}', space=sflag, size = 0x8, scoped, tag = 'scoped memory for tpu_custom_call.1']
    #allocation5 [shape = 'u8[8192]{0}', space=vmem, size = 0x2000, scoped, tag = 'output window, operand 0']
    %8 = vsyncpa [#allocation3], 0
    %s9 = scalar_lea.sflag [#allocation3], 1
    %10 = vsyncpa %s9, 0
    %11 = vsyncpa [#allocation4], 0
    %s12 = scalar_lea.sflag [#allocation4], 1
    %13 = vsyncpa %s12, 0
    loop: start=0, step=1, limit=4
    $region2: #{tpu_custom_call.1} parent=1 // loop_pre_header
      _
    $region3: #{tpu_custom_call.1} parent=1 // loop_header
      %s15 = sphi 0, %s19
      %p16 = scmp.ge.s32.totalorder %s15, 4
      %s22 = sphi 0, %s34
      %s23 = sphi 0, %s30
      %s24 = sphi 0, %s22
      %s25 = sphi 0, %s23
      %s26 = sphi 0, %s24
      %s27 = sphi 0, %s25
      %s35 = sphi 0, %s35
      %s37 = sphi 0, %s35
      %s38 = sphi 0, %s37
      %s52 = sphi 0, %s38
      %s56 = sphi 0, %s56
      %s58 = sphi 0, %s56
      %s59 = sphi 0, %s58
      %s73 = sphi 0, %s59
      %s81 = sphi 0, %s83
      %s84 = sphi 0, %s81
      %s85 = sphi 0, %s84
      %s101 = sphi 0, %s85
      %s109 = sphi 0, %s111
      %s112 = sphi 0, %s109
      %s113 = sphi 0, %s112
      %s129 = sphi 0, %s113
    $region4: #{tpu_custom_call.1} parent=1 // loop_header_branch
      %18 = sbr.rel (%p16) target = $region8
    $region5: #{tpu_custom_call.1} parent=1 // loop_body
      %s20 = ssub.s32 %s15, 1
      %s21 = ssub.s32 %s15, 2
      %s28 = sadd.s32 1, %s23
      %p29 = scmp.ge.s32.totalorder %s28, 1
      %s30 = scalar_select %p29, 0, %s28
      %s31 = sadd.s32 1, %s22
      %s32 = scalar_select %p29, %s31, %s22
      %p33 = scmp.ge.s32.totalorder %s32, 2
      %s34 = scalar_select %p33, 0, %s32
      %s36 = sadd.s32 %s35, 1
      %p39 = scmp.eq.s32.totalorder %s15, 1
      %p40 = scmp.ne.s32.totalorder %s35, %s37
      %p41 = scmp.eq.s32.totalorder %s15, 0
      %p42 = por %p40, %p41
      %p43 = scmp.ne.s32.totalorder %s35, %s37
      %p44 = scmp.eq.s32.totalorder %s20, 1
      %p45 = por %p43, %p44
      %p46 = scmp.ne.s32.totalorder %s37, %s38
      %p47 = scmp.eq.s32.totalorder %s20, 0
      %p48 = por %p46, %p47
      %p49 = scmp.ne.s32.totalorder %s37, %s38
      %p50 = scmp.eq.s32.totalorder %s21, 1
      %p51 = por %p49, %p50
      %p53 = scmp.ne.s32.totalorder %s38, %s52
      %p54 = scmp.eq.s32.totalorder %s21, 0
      %p55 = por %p53, %p54
      %s57 = sadd.s32 %s56, 1
      %p60 = scmp.eq.s32.totalorder %s15, 1
      %p61 = scmp.ne.s32.totalorder %s56, %s58
      %p62 = scmp.eq.s32.totalorder %s15, 0
      %p63 = por %p61, %p62
      %p64 = scmp.ne.s32.totalorder %s56, %s58
      %p65 = scmp.eq.s32.totalorder %s20, 1
      %p66 = por %p64, %p65
      %p67 = scmp.ne.s32.totalorder %s58, %s59
      %p68 = scmp.eq.s32.totalorder %s20, 0
      %p69 = por %p67, %p68
      %p70 = scmp.ne.s32.totalorder %s58, %s59
      %p71 = scmp.eq.s32.totalorder %s21, 1
      %p72 = por %p70, %p71
      %p74 = scmp.ne.s32.totalorder %s59, %s73
      %p75 = scmp.eq.s32.totalorder %s21, 0
      %p76 = por %p74, %p75
      %s77 = ssub.s32 %s22, %s34
      %s78 = ssub.s32 %s23, %s30
      %s79 = sor.u32 %s77, %s78
      %p80 = scmp.eq.s32.totalorder %s79, 0
      %s82 = sadd.s32 %s81, 1
      %s83 = scalar_select %p80, %s81, %s82
      %p86 = pneg %p80
      %p87 = scmp.eq.s32.totalorder %s15, 1
      %p88 = por %p86, %p87
      %p89 = scmp.ne.s32.totalorder %s81, %s84
      %p90 = scmp.eq.s32.totalorder %s15, 0
      %p91 = por %p89, %p90
      %p92 = scmp.ne.s32.totalorder %s81, %s84
      %p93 = scmp.eq.s32.totalorder %s20, 1
      %p94 = por %p92, %p93
      %p95 = scmp.ne.s32.totalorder %s84, %s85
      %p96 = scmp.eq.s32.totalorder %s20, 0
      %p97 = por %p95, %p96
      %p98 = scmp.ne.s32.totalorder %s84, %s85
      %p99 = scmp.eq.s32.totalorder %s21, 1
      %p100 = por %p98, %p99
      %p102 = scmp.ne.s32.totalorder %s85, %s101
      %p103 = scmp.eq.s32.totalorder %s21, 0
      %p104 = por %p102, %p103
      %s105 = ssub.s32 %s22, %s34
      %s106 = ssub.s32 %s23, %s30
      %s107 = sor.u32 %s105, %s106
      %p108 = scmp.eq.s32.totalorder %s107, 0
      %s110 = sadd.s32 %s109, 1
      %s111 = scalar_select %p108, %s109, %s110
      %p114 = pneg %p108
      %p115 = scmp.eq.s32.totalorder %s15, 1
      %p116 = por %p114, %p115
      %p117 = scmp.ne.s32.totalorder %s109, %s112
      %p118 = scmp.eq.s32.totalorder %s15, 0
      %p119 = por %p117, %p118
      %p120 = scmp.ne.s32.totalorder %s109, %s112
      %p121 = scmp.eq.s32.totalorder %s20, 1
      %p122 = por %p120, %p121
      %p123 = scmp.ne.s32.totalorder %s112, %s113
      %p124 = scmp.eq.s32.totalorder %s20, 0
      %p125 = por %p123, %p124
      %p126 = scmp.ne.s32.totalorder %s112, %s113
      %p127 = scmp.eq.s32.totalorder %s21, 1
      %p128 = por %p126, %p127
      %p130 = scmp.ne.s32.totalorder %s113, %s129
      %p131 = scmp.eq.s32.totalorder %s21, 0
      %p132 = por %p130, %p131
      %p133 = scmp.le.s32.totalorder 1, %s15
      %p134 = scmp.lt.s32.totalorder %s15, 3
      %p135 = pnand %p133, %p134
      %p136 = pneg %p135
      // Predicated region
      $region9: #{tpu_custom_call.1} parent=5 // pred_check
        _
      $region10: #{tpu_custom_call.1} parent=5 // pred_check_branch
        %138 = sbr.rel (%p135) target = $region12
      $region11: #{tpu_custom_call.1} parent=5 // pred_region
        %s139 = ssub.s32 %s15, 1
        // Predicated region
        $region13: #{tpu_custom_call.1} parent=11 // pred_check
          %p140 = pneg %p48
        $region14: #{tpu_custom_call.1} parent=11 // pred_check_branch
          %142 = sbr.rel (%p140) target = $region16
        $region15: #{tpu_custom_call.1} parent=11 // pred_region
          _
        $region16: #{tpu_custom_call.1} parent=11 // pred_fallthru
          _
        // Predicated region
        $region17: #{tpu_custom_call.1} parent=11 // pred_check
          %p143 = pneg %p69
        $region18: #{tpu_custom_call.1} parent=11 // pred_check_branch
          %145 = sbr.rel (%p143) target = $region20
        $region19: #{tpu_custom_call.1} parent=11 // pred_region
          _
        $region20: #{tpu_custom_call.1} parent=11 // pred_fallthru
          _
      $region12: #{tpu_custom_call.1} parent=5 // pred_fallthru
        _
      %p146 = scmp.lt.s32.totalorder %s15, 2
      // Predicated region
      $region21: #{tpu_custom_call.1} parent=5 // pred_check
        %p147 = pneg %p146
      $region22: #{tpu_custom_call.1} parent=5 // pred_check_branch
        %149 = sbr.rel (%p147) target = $region24
      $region23: #{tpu_custom_call.1} parent=5 // pred_region
        // Predicated region
        $region25: #{tpu_custom_call.1} parent=23 // pred_check
          %p150 = pneg %p91
        $region26: #{tpu_custom_call.1} parent=23 // pred_check_branch
          %152 = sbr.rel (%p150) target = $region28
        $region27: #{tpu_custom_call.1} parent=23 // pred_region
          %s153 = sand.u32 %s81, 1
          %s154 = scalar_lea.sflag [#allocation3], %s153
          %s155 = sand.u32 %s81, 1
          %s156 = smul.addr %s155, 8
          %s157 = scalar_lea.vmem [#allocation2], %s156
          %s158 = smul.u32 2, %s23
          %160 = vsyncadd %s154, 0
          %s161 = smul.addr %s22, 2
          %s162 = sadd.s32 %s158, %s161
          %s163 = smul.addr %s162, 4
          %s164 = scalar_lea.hbm %s2, %s163
          %s166 = sshll.u32 %s164, 4
          %s167 = int_to_ptr.hbm [resolvable:$true] %s166
          %s168 = sshll.u32 %s157, 4
          %s169 = int_to_ptr.vmem [resolvable:$true] %s168
          %171 = dma.hbm_to_vmem [thread:$0]  %s167, 128, %s169, %s154
        $region28: #{tpu_custom_call.1} parent=23 // pred_fallthru
          _
      $region24: #{tpu_custom_call.1} parent=5 // pred_fallthru
        _
      %p172 = scmp.le.s32.totalorder 1, %s15
      %p173 = scmp.lt.s32.totalorder %s15, 3
      %p174 = pnand %p172, %p173
      %p175 = pneg %p174
      // Predicated region
      $region29: #{tpu_custom_call.1} parent=5 // pred_check
        _
      $region30: #{tpu_custom_call.1} parent=5 // pred_check_branch
        %177 = sbr.rel (%p174) target = $region32
      $region31: #{tpu_custom_call.1} parent=5 // pred_region
        %s178 = ssub.s32 %s15, 1
        %s179 = sand.u32 %s84, 1
        %s180 = scalar_lea.sflag [#allocation3], %s179
        %s181 = sand.u32 %s84, 1
        %s182 = smul.addr %s181, 8
        %s183 = scalar_lea.vmem [#allocation2], %s182
        // Predicated region
        $region33: #{tpu_custom_call.1} parent=31 // pred_check
          %p184 = pneg %p97
        $region34: #{tpu_custom_call.1} parent=31 // pred_check_branch
          %186 = sbr.rel (%p184) target = $region36
        $region35: #{tpu_custom_call.1} parent=31 // pred_region
          %188 = dma.done %s180, 128
        $region36: #{tpu_custom_call.1} parent=31 // pred_fallthru
          _
        %p189 = pneg %p48
        %p190 = pneg %p45
        %p191 = pneg %p69
        %p192 = pneg %p66
        %s193 = sand.u32 %s84, 1
        %s194 = scalar_lea.sflag [#allocation3], %s193
        %s195 = sand.u32 %s84, 1
        %s196 = smul.addr %s195, 8
        %s197 = scalar_lea.vmem [#allocation2], %s196
        %p198 = pneg %p97
        %p199 = pneg %p94
        %p200 = pneg %p125
        %p201 = pneg %p122
        %s202 = sand.u32 %s112, 1
        %s203 = scalar_lea.sflag [#allocation4], %s202
        %s204 = sand.u32 %s112, 1
        %s205 = smul.addr %s204, 8
        %s206 = scalar_lea.vmem [#allocation5], %s205
        %s207 = smul.u32 2, %s25
        %s208 = smul.u32 2, %s25
        %v209 = vld [vmem:[%s183] sm:$0xff]
        %v210 = vld [vmem:[%s0] sm:$0xf]
        %v211 = vld [vmem:[%s1] sm:$0xf]
        %213 = vset.pattern.permute.xlu0 0
        %214 = vperm.xlu0 %213, %v211
        %v215 = vpop.permute.xlu0 %214
        %218 = vst [vmem:[#allocation1] ss:$2 sm:$0xff] %v209
        %v219 = vld.sshfl [vmem:[#allocation1] sm:$0xff pattern:$0x75316420]
        %v220 = vld.sshfl [vmem:[#allocation1 + $0x8] sm:$0xff pattern:$0x75316420]
        %vm221 = vcmask 31744
        %v223 = vsel %vm221, %v210, 0
        %vm225 = vcmask 1043456
        %v226 = vsel %vm225, %v219, 0
        %v228 = vsel %vm225, %v220, 0
        %230 = vmatpush.msra.mxu0 0.0
        %231 = vmatpush.msra.mxu0 0.0
        %232 = vmatpush.msra.mxu0 0.0
        %233 = vmatpush.msra.mxu0 0.0
        %234 = vmatpush.msra.mxu0 0.0
        %235 = vmatpush.msra.mxu0 0.0
        %236 = vmatpush.msra.mxu0 0.0
        %237 = vmatpush.msra.mxu0 0.0
        %238 = vmatpush.msra.mxu0 0.0
        %239 = vmatpush.msra.mxu0 0.0
        %240 = vmatpush.msra.mxu0 0.0
        %241 = vmatpush.msra.mxu0 0.0
        %242 = vmatpush.msra.mxu0 0.0
        %243 = vmatpush.msra.mxu0 0.0
        %244 = vmatpush.msra.mxu0 0.0
        %245 = vmatpush.msra.mxu0 %v226
        %246 = vmatmul.f32.gmra.mxu0 %v223
        %v247 = vpop.f32.mrf.mxu0
        %v248 = vadd.f32 %v215, %v247
        %249 = vdwg.mxu0
        %250 = vmatpush.msra.mxu0 0.0
        %251 = vmatpush.msra.mxu0 0.0
        %252 = vmatpush.msra.mxu0 0.0
        %253 = vmatpush.msra.mxu0 0.0
        %254 = vmatpush.msra.mxu0 0.0
        %255 = vmatpush.msra.mxu0 0.0
        %256 = vmatpush.msra.mxu0 0.0
        %257 = vmatpush.msra.mxu0 0.0
        %258 = vmatpush.msra.mxu0 0.0
        %259 = vmatpush.msra.mxu0 0.0
        %260 = vmatpush.msra.mxu0 0.0
        %261 = vmatpush.msra.mxu0 0.0
        %262 = vmatpush.msra.mxu0 0.0
        %263 = vmatpush.msra.mxu0 0.0
        %264 = vmatpush.msra.mxu0 0.0
        %265 = vmatpush.msra.mxu0 %v228
        %266 = vmatmul.f32.gmra.mxu0 %v223
        %v267 = vpop.f32.mrf.mxu0
        %v268 = vadd.f32 %v215, %v267
        %269 = vdwg.mxu0
        %270 = vst [vmem:[#allocation1] ss:$2 sm:$0xff] %v209
        %v271 = vld.sshfl [vmem:[#allocation1] sm:$0xff pattern:$0x75316420]
        %v272 = vld.sshfl [vmem:[#allocation1 + $0x8] sm:$0xff pattern:$0x75316420]
        %v275 = vadd.f32 %v248, %v271
        %v276 = vadd.f32 %v268, %v272
        %v279 = vrot.slane %v276, 4
        %v280 = vsel %vm225, %v275, %v279
        %282 = vst [vmem:[%s206] sm:$0xff] %v280
        %s283 = sand.u32 %s112, 1
        %s284 = scalar_lea.sflag [#allocation4], %s283
        %s285 = sand.u32 %s112, 1
        %s286 = smul.addr %s285, 8
        %s287 = scalar_lea.vmem [#allocation5], %s286
        // Predicated region
        $region37: #{tpu_custom_call.1} parent=31 // pred_check
          %p288 = pneg %p122
        $region38: #{tpu_custom_call.1} parent=31 // pred_check_branch
          %290 = sbr.rel (%p288) target = $region40
        $region39: #{tpu_custom_call.1} parent=31 // pred_region
          %s291 = smul.u32 2, %s25
          %293 = vsyncadd %s284, 0
          %s294 = smul.addr %s24, 2
          %s295 = sadd.s32 %s291, %s294
          %s296 = smul.addr %s295, 4
          %s297 = scalar_lea.hbm %s3, %s296
          %s299 = sshll.u32 %s287, 4
          %s300 = int_to_ptr.vmem [resolvable:$true] %s299
          %s301 = sshll.u32 %s297, 4
          %s302 = int_to_ptr.hbm [resolvable:$true] %s301
          %304 = dma.vmem_to_hbm [thread:$0]  %s300, 128, %s302, %s284
        $region40: #{tpu_custom_call.1} parent=31 // pred_fallthru
          _
      $region32: #{tpu_custom_call.1} parent=5 // pred_fallthru
        _
      %p305 = scmp.le.s32.totalorder 2, %s15
      // Predicated region
      $region41: #{tpu_custom_call.1} parent=5 // pred_check
        %p306 = pneg %p305
      $region42: #{tpu_custom_call.1} parent=5 // pred_check_branch
        %308 = sbr.rel (%p306) target = $region44
      $region43: #{tpu_custom_call.1} parent=5 // pred_region
        %s309 = ssub.s32 %s15, 2
        // Predicated region
        $region45: #{tpu_custom_call.1} parent=43 // pred_check
          %p310 = pneg %p128
        $region46: #{tpu_custom_call.1} parent=43 // pred_check_branch
          %312 = sbr.rel (%p310) target = $region48
        $region47: #{tpu_custom_call.1} parent=43 // pred_region
          %s313 = sand.u32 %s113, 1
          %s314 = scalar_lea.sflag [#allocation4], %s313
          %s315 = sand.u32 %s113, 1
          %s316 = smul.addr %s315, 8
          %s317 = scalar_lea.vmem [#allocation5], %s316
          %319 = dma.done %s314, 128
        $region48: #{tpu_custom_call.1} parent=43 // pred_fallthru
          _
      $region44: #{tpu_custom_call.1} parent=5 // pred_fallthru
        _
    $region6: #{tpu_custom_call.1} parent=1 // loop_footer
      %s19 = sadd.s32 1, %s15
    $region7: #{tpu_custom_call.1} parent=1 // loop_footer_branch
      %14 = sbr.rel target = $region3
    $region8: #{tpu_custom_call.1} parent=1 // loop_exit
      _
    %320 = vsyncpa [#allocation3], 1
    %s321 = scalar_lea.sflag [#allocation3], 1
    %322 = vsyncpa %s321, 1
    %323 = vsyncpa [#allocation4], 1
    %s324 = scalar_lea.sflag [#allocation4], 1
    %325 = vsyncpa %s324, 1

</llo_original>
